<compile_context>
chip_gen: v6e
topology: v6e:2x2x1
jax: 0.10.0
libtpu: 0.0.40
codegen_flags: <defaults>
</compile_context>

<pallas_src>
import jax
import jax.numpy as jnp
from jax.experimental import pallas as pl
from jax.experimental.pallas import tpu as pltpu

_LANE = 128          # pad all feature dims to one full lane width
_NUM_LAYERS = 4


# ----------------------------------------------------------------------------
# Fused Pallas kernel: 4x ( H <- relu(A_hat @ (H @ W_l) + b_l) ), sigmoid last.
# ----------------------------------------------------------------------------
def _graphnet_kernel(a_ref, x_ref, w_ref, b_ref, o_ref):
    # a_ref: [N, N]  bf16   (normalized adjacency D^-1/2 (A+I) D^-1/2)
    # x_ref: [N, P]  f32    (node features, P = 128 lane-padded)
    # w_ref: [4, P, P] bf16 (per-layer weights, zero-padded)
    # b_ref: [4, 1, P] f32  (per-layer biases, zero-padded)
    # o_ref: [N, P]  f32    (final slab; column 0 is the real conv4 output)
    a_bf = a_ref[...]                                # already bf16, stays on-chip
    h = x_ref[...]                                   # f32, stays on-chip
    for layer in range(_NUM_LAYERS):                 # static unroll (4 layers)
        xw = jnp.dot(h.astype(jnp.bfloat16), w_ref[layer],
                     preferred_element_type=jnp.float32)        # MXU: H @ W
        agg = jnp.dot(a_bf, xw.astype(jnp.bfloat16),
                      preferred_element_type=jnp.float32)       # MXU: A @ (HW)
        h = jnp.maximum(agg + b_ref[layer], 0.0)                # bias + ReLU (VPU)
    # head: sigmoid(relu(conv4(...)))  (relu already applied above) -> EUP
    o_ref[...] = jax.nn.sigmoid(h)


def graphnet_fused(a_hat_bf16, x_pad, w_stack, b_stack):
    """One pallas_call running the whole 4-layer GCN stack on-chip."""
    n = a_hat_bf16.shape[0]
    p = w_stack.shape[-1]
    flops = _NUM_LAYERS * (2 * n * p * p + 2 * n * n * p)
    bytes_accessed = (a_hat_bf16.size * 2 + x_pad.size * 4 + w_stack.size * 2
                      + b_stack.size * 4 + n * p * 4)
    return pl.pallas_call(
        _graphnet_kernel,
        out_shape=jax.ShapeDtypeStruct((n, p), jnp.float32),
        grid=(1,),
        in_specs=[
            pl.BlockSpec((n, n), lambda i: (0, 0)),
            pl.BlockSpec((n, p), lambda i: (0, 0)),
            pl.BlockSpec((_NUM_LAYERS, p, p), lambda i: (0, 0, 0)),
            pl.BlockSpec((_NUM_LAYERS, 1, p), lambda i: (0, 0, 0)),
        ],
        out_specs=pl.BlockSpec((n, p), lambda i: (0, 0)),
        compiler_params=pltpu.CompilerParams(
            dimension_semantics=("arbitrary",)),
        cost_estimate=pl.CostEstimate(
            flops=flops, transcendentals=n * p, bytes_accessed=bytes_accessed),
    )(a_hat_bf16, x_pad, w_stack, b_stack)


# ----------------------------------------------------------------------------
# Plain-JAX glue: graph construction, GCN normalization, parameter packing
# ----------------------------------------------------------------------------
def build_norm_adj(edge_index, num_nodes):
    """Dense D^{-1/2}(A + I)D^{-1/2}, matching PyG GCNConv default semantics."""
    src, dst = edge_index
    a = jnp.zeros((num_nodes, num_nodes), jnp.float32)
    a = a.at[src, dst].set(1.0)
    diag = jnp.arange(num_nodes)
    a = a.at[diag, diag].set(1.0)  # add self-loops
    deg = a.sum(axis=1)
    d_inv_sqrt = jnp.where(deg > 0, 1.0 / jnp.sqrt(deg), 0.0)
    return a * d_inv_sqrt[:, None] * d_inv_sqrt[None, :]


def glorot(key, shape):
    fan_in, fan_out = shape
    limit = jnp.sqrt(6.0 / (fan_in + fan_out))
    return jax.random.uniform(key, shape, jnp.float32, -limit, limit)


def init_params(key, in_channels, hidden_channels, out_channels):
    ks = jax.random.split(key, 4)
    return {
        "conv1": (glorot(ks[0], (in_channels, hidden_channels)),
                  jnp.zeros((1, hidden_channels), jnp.float32)),
        "conv2": (glorot(ks[1], (hidden_channels, hidden_channels)),
                  jnp.zeros((1, hidden_channels), jnp.float32)),
        "conv3": (glorot(ks[2], (hidden_channels, out_channels)),
                  jnp.zeros((1, out_channels), jnp.float32)),
        "conv4": (glorot(ks[3], (out_channels, 1)),
                  jnp.zeros((1, 1), jnp.float32)),
    }


def _pad_to(x, shape):
    pads = [(0, t - s) for s, t in zip(x.shape, shape)]
    return jnp.pad(x, pads)


def pack_params(params):
    """Zero-pad every W to [P, P] (bf16) and b to [1, P] (f32); stack by layer."""
    ws, bs = [], []
    for name in ("conv1", "conv2", "conv3", "conv4"):
        w, b = params[name]
        ws.append(_pad_to(w, (_LANE, _LANE)))
        bs.append(_pad_to(b, (1, _LANE)))
    w_stack = jnp.stack(ws).astype(jnp.bfloat16)   # [4, P, P]
    b_stack = jnp.stack(bs).astype(jnp.float32)    # [4, 1, P]
    return w_stack, b_stack


@jax.jit
def graphnet1_forward(w_stack, b_stack, a_hat, edge_index, x):
    n = x.shape[0]
    n_pad = ((n + 7) // 8) * 8                     # sublane-align the node dim
    x_pad = _pad_to(x, (n_pad, _LANE))             # lane-dense feature slab
    a_pad = _pad_to(a_hat, (n_pad, n_pad)).astype(jnp.bfloat16)

    # conv1..conv3 (ReLU) + conv4 (ReLU + sigmoid) fused in one kernel.
    out_slab = graphnet_fused(a_pad, x_pad, w_stack, b_stack)
    x1 = out_slab[:n, :1]                          # conv4 has out_channels == 1

    # TODO(synk): RicciCurvaturePooling1 is not defined in the reference code;
    # identity pooling is used (graph topology and node set unchanged), so
    # conv4 runs on the same normalized adjacency as conv1-3.
    new_edge_index1 = edge_index
    unpool_info = {"perm": jnp.arange(n, dtype=jnp.int32)}
    fitness = jnp.zeros((n,), jnp.float32)
    loss1 = jnp.float32(0.0)
    return x1, new_edge_index1, unpool_info, fitness, loss1


# ----------------------------------------------------------------------------
if __name__ == "__main__":
    # Small graph: 16 nodes, ring + a few chords (undirected -> both directions).
    N = 16
    IN_CH, HID_CH, OUT_CH = 4, 32, 8

    undirected = [(i, (i + 1) % N) for i in range(N)] + [(0, 8), (3, 11), (5, 13)]
    src = [u for (u, v) in undirected] + [v for (u, v) in undirected]
    dst = [v for (u, v) in undirected] + [u for (u, v) in undirected]
    edge_index = jnp.array([src, dst], dtype=jnp.int32)  # [2, E]

    key = jax.random.PRNGKey(0)
    k_x, k_p = jax.random.split(key)
    x = jax.random.normal(k_x, (N, IN_CH), jnp.float32)
    params = init_params(k_p, IN_CH, HID_CH, OUT_CH)

    # Precompute once (outside the jitted forward hot path).
    a_hat = build_norm_adj(edge_index, N)
    w_stack, b_stack = pack_params(params)

    x1, new_ei, unpool_info, fitness, loss1 = graphnet1_forward(
        w_stack, b_stack, a_hat, edge_index, x)
    jax.block_until_ready(x1)

    assert x1.shape == (N, 1)
    assert bool(jnp.all((x1 >= 0.0) & (x1 <= 1.0)))
    print("KERNEL_OK")
</pallas_src>

<mosaic_0001>
module attributes {stable_mosaic.version = 11 : i64} {
  func.func @_graphnet_kernel(%arg0: i32, %arg1: memref<16x16xbf16, #tpu.memory_space<vmem>>, %arg2: memref<16x128xf32, #tpu.memory_space<vmem>>, %arg3: memref<4x128x128xbf16, #tpu.memory_space<vmem>>, %arg4: memref<4x1x128xf32, #tpu.memory_space<vmem>>, %arg5: memref<16x128xf32, #tpu.memory_space<vmem>>) attributes {dimension_semantics = [#tpu.dimension_semantics<arbitrary>], iteration_bounds = array<i64: 1>, scalar_prefetch = 0 : i64, scratch_operands = 0 : i64, tpu.core_type = #tpu.core_type<tc>, window_params = [{pipeline_mode = #tpu.pipeline_mode<synchronous>, transform_indices = @transform_0, window_bounds = array<i64: 16, 16>}, {pipeline_mode = #tpu.pipeline_mode<synchronous>, transform_indices = @transform_1, window_bounds = array<i64: 16, 128>}, {pipeline_mode = #tpu.pipeline_mode<synchronous>, transform_indices = @transform_2, window_bounds = array<i64: 4, 128, 128>}, {pipeline_mode = #tpu.pipeline_mode<synchronous>, transform_indices = @transform_3, window_bounds = array<i64: 4, 1, 128>}, {pipeline_mode = #tpu.pipeline_mode<synchronous>, transform_indices = @transform_4, window_bounds = array<i64: 16, 128>}]} {
    %c0 = arith.constant 0 : index
    %c0_0 = arith.constant 0 : index
    %0 = vector.load %arg1[%c0, %c0_0] : memref<16x16xbf16, #tpu.memory_space<vmem>>, vector<16x16xbf16>
    %c0_1 = arith.constant 0 : index
    %c0_2 = arith.constant 0 : index
    %1 = vector.load %arg2[%c0_1, %c0_2] : memref<16x128xf32, #tpu.memory_space<vmem>>, vector<16x128xf32>
    %2 = arith.truncf %1 : vector<16x128xf32> to vector<16x128xbf16>
    %c0_3 = arith.constant 0 : index
    %c0_4 = arith.constant 0 : index
    %c0_5 = arith.constant 0 : index
    %3 = vector.load %arg3[%c0_3, %c0_4, %c0_5] : memref<4x128x128xbf16, #tpu.memory_space<vmem>>, vector<1x128x128xbf16>
    %4 = vector.shape_cast %3 : vector<1x128x128xbf16> to vector<128x128xbf16>
    %cst = arith.constant dense<0.000000e+00> : vector<16x128xf32>
    %5 = tpu.matmul %2, %4, %cst {dimension_numbers = #tpu.dot_dimension_numbers<[1], [0], [0], [1], [0, 0, 1, 1], [], []>} : vector<16x128xbf16>, vector<128x128xbf16>, vector<16x128xf32> -> vector<16x128xf32>
    %6 = arith.truncf %5 : vector<16x128xf32> to vector<16x128xbf16>
    %cst_6 = arith.constant dense<0.000000e+00> : vector<16x128xf32>
    %7 = tpu.matmul %0, %6, %cst_6 {dimension_numbers = #tpu.dot_dimension_numbers<[1], [0], [0], [1], [0, 0, 1, 1], [], []>} : vector<16x16xbf16>, vector<16x128xbf16>, vector<16x128xf32> -> vector<16x128xf32>
    %c0_7 = arith.constant 0 : index
    %c0_8 = arith.constant 0 : index
    %c0_9 = arith.constant 0 : index
    %8 = vector.load %arg4[%c0_7, %c0_8, %c0_9] : memref<4x1x128xf32, #tpu.memory_space<vmem>>, vector<1x1x128xf32>
    %9 = vector.shape_cast %8 : vector<1x1x128xf32> to vector<1x128xf32>
    %10 = vector.broadcast %9 : vector<1x128xf32> to vector<16x128xf32>
    %11 = arith.addf %7, %10 : vector<16x128xf32>
    %cst_10 = arith.constant 0.000000e+00 : f32
    %12 = vector.broadcast %cst_10 : f32 to vector<16x128xf32>
    %13 = arith.maximumf %11, %12 : vector<16x128xf32>
    %14 = arith.truncf %13 : vector<16x128xf32> to vector<16x128xbf16>
    %c1 = arith.constant 1 : index
    %c0_11 = arith.constant 0 : index
    %c0_12 = arith.constant 0 : index
    %15 = vector.load %arg3[%c1, %c0_11, %c0_12] : memref<4x128x128xbf16, #tpu.memory_space<vmem>>, vector<1x128x128xbf16>
    %16 = vector.shape_cast %15 : vector<1x128x128xbf16> to vector<128x128xbf16>
    %cst_13 = arith.constant dense<0.000000e+00> : vector<16x128xf32>
    %17 = tpu.matmul %14, %16, %cst_13 {dimension_numbers = #tpu.dot_dimension_numbers<[1], [0], [0], [1], [0, 0, 1, 1], [], []>} : vector<16x128xbf16>, vector<128x128xbf16>, vector<16x128xf32> -> vector<16x128xf32>
    %18 = arith.truncf %17 : vector<16x128xf32> to vector<16x128xbf16>
    %cst_14 = arith.constant dense<0.000000e+00> : vector<16x128xf32>
    %19 = tpu.matmul %0, %18, %cst_14 {dimension_numbers = #tpu.dot_dimension_numbers<[1], [0], [0], [1], [0, 0, 1, 1], [], []>} : vector<16x16xbf16>, vector<16x128xbf16>, vector<16x128xf32> -> vector<16x128xf32>
    %c1_15 = arith.constant 1 : index
    %c0_16 = arith.constant 0 : index
    %c0_17 = arith.constant 0 : index
    %20 = vector.load %arg4[%c1_15, %c0_16, %c0_17] : memref<4x1x128xf32, #tpu.memory_space<vmem>>, vector<1x1x128xf32>
    %21 = vector.shape_cast %20 : vector<1x1x128xf32> to vector<1x128xf32>
    %22 = vector.broadcast %21 : vector<1x128xf32> to vector<16x128xf32>
    %23 = arith.addf %19, %22 : vector<16x128xf32>
    %cst_18 = arith.constant 0.000000e+00 : f32
    %24 = vector.broadcast %cst_18 : f32 to vector<16x128xf32>
    %25 = arith.maximumf %23, %24 : vector<16x128xf32>
    %26 = arith.truncf %25 : vector<16x128xf32> to vector<16x128xbf16>
    %c2 = arith.constant 2 : index
    %c0_19 = arith.constant 0 : index
    %c0_20 = arith.constant 0 : index
    %27 = vector.load %arg3[%c2, %c0_19, %c0_20] : memref<4x128x128xbf16, #tpu.memory_space<vmem>>, vector<1x128x128xbf16>
    %28 = vector.shape_cast %27 : vector<1x128x128xbf16> to vector<128x128xbf16>
    %cst_21 = arith.constant dense<0.000000e+00> : vector<16x128xf32>
    %29 = tpu.matmul %26, %28, %cst_21 {dimension_numbers = #tpu.dot_dimension_numbers<[1], [0], [0], [1], [0, 0, 1, 1], [], []>} : vector<16x128xbf16>, vector<128x128xbf16>, vector<16x128xf32> -> vector<16x128xf32>
    %30 = arith.truncf %29 : vector<16x128xf32> to vector<16x128xbf16>
    %cst_22 = arith.constant dense<0.000000e+00> : vector<16x128xf32>
    %31 = tpu.matmul %0, %30, %cst_22 {dimension_numbers = #tpu.dot_dimension_numbers<[1], [0], [0], [1], [0, 0, 1, 1], [], []>} : vector<16x16xbf16>, vector<16x128xbf16>, vector<16x128xf32> -> vector<16x128xf32>
    %c2_23 = arith.constant 2 : index
    %c0_24 = arith.constant 0 : index
    %c0_25 = arith.constant 0 : index
    %32 = vector.load %arg4[%c2_23, %c0_24, %c0_25] : memref<4x1x128xf32, #tpu.memory_space<vmem>>, vector<1x1x128xf32>
    %33 = vector.shape_cast %32 : vector<1x1x128xf32> to vector<1x128xf32>
    %34 = vector.broadcast %33 : vector<1x128xf32> to vector<16x128xf32>
    %35 = arith.addf %31, %34 : vector<16x128xf32>
    %cst_26 = arith.constant 0.000000e+00 : f32
    %36 = vector.broadcast %cst_26 : f32 to vector<16x128xf32>
    %37 = arith.maximumf %35, %36 : vector<16x128xf32>
    %38 = arith.truncf %37 : vector<16x128xf32> to vector<16x128xbf16>
    %c3 = arith.constant 3 : index
    %c0_27 = arith.constant 0 : index
    %c0_28 = arith.constant 0 : index
    %39 = vector.load %arg3[%c3, %c0_27, %c0_28] : memref<4x128x128xbf16, #tpu.memory_space<vmem>>, vector<1x128x128xbf16>
    %40 = vector.shape_cast %39 : vector<1x128x128xbf16> to vector<128x128xbf16>
    %cst_29 = arith.constant dense<0.000000e+00> : vector<16x128xf32>
    %41 = tpu.matmul %38, %40, %cst_29 {dimension_numbers = #tpu.dot_dimension_numbers<[1], [0], [0], [1], [0, 0, 1, 1], [], []>} : vector<16x128xbf16>, vector<128x128xbf16>, vector<16x128xf32> -> vector<16x128xf32>
    %42 = arith.truncf %41 : vector<16x128xf32> to vector<16x128xbf16>
    %cst_30 = arith.constant dense<0.000000e+00> : vector<16x128xf32>
    %43 = tpu.matmul %0, %42, %cst_30 {dimension_numbers = #tpu.dot_dimension_numbers<[1], [0], [0], [1], [0, 0, 1, 1], [], []>} : vector<16x16xbf16>, vector<16x128xbf16>, vector<16x128xf32> -> vector<16x128xf32>
    %c3_31 = arith.constant 3 : index
    %c0_32 = arith.constant 0 : index
    %c0_33 = arith.constant 0 : index
    %44 = vector.load %arg4[%c3_31, %c0_32, %c0_33] : memref<4x1x128xf32, #tpu.memory_space<vmem>>, vector<1x1x128xf32>
    %45 = vector.shape_cast %44 : vector<1x1x128xf32> to vector<1x128xf32>
    %46 = vector.broadcast %45 : vector<1x128xf32> to vector<16x128xf32>
    %47 = arith.addf %43, %46 : vector<16x128xf32>
    %cst_34 = arith.constant 0.000000e+00 : f32
    %48 = vector.broadcast %cst_34 : f32 to vector<16x128xf32>
    %49 = arith.maximumf %47, %48 : vector<16x128xf32>
    %50 = arith.negf %49 : vector<16x128xf32>
    %51 = math.exp %50 : vector<16x128xf32>
    %cst_35 = arith.constant 1.000000e+00 : f32
    %52 = vector.broadcast %cst_35 : f32 to vector<16x128xf32>
    %53 = arith.addf %52, %51 : vector<16x128xf32>
    %54 = arith.divf %52, %53 : vector<16x128xf32>
    %c0_36 = arith.constant 0 : index
    %c0_37 = arith.constant 0 : index
    %55 = vector.load %arg5[%c0_36, %c0_37] : memref<16x128xf32, #tpu.memory_space<vmem>>, vector<16x128xf32>
    tpu.vector_store %arg5[%c0_36, %c0_37], %54 {strides = array<i32>} : memref<16x128xf32, #tpu.memory_space<vmem>>, vector<16x128xf32>,
    return
  }
  func.func @transform_0(%arg0: i32) -> (i32, i32) {
    %c0_i32 = arith.constant 0 : i32
    %c0_i32_0 = arith.constant 0 : i32
    %c0_i32_1 = arith.constant 0 : i32
    return %c0_i32, %c0_i32_0 : i32, i32
  }
  func.func @transform_1(%arg0: i32) -> (i32, i32) {
    %c0_i32 = arith.constant 0 : i32
    %c0_i32_0 = arith.constant 0 : i32
    %c0_i32_1 = arith.constant 0 : i32
    return %c0_i32, %c0_i32_0 : i32, i32
  }
  func.func @transform_2(%arg0: i32) -> (i32, i32, i32) {
    %c0_i32 = arith.constant 0 : i32
    %c0_i32_0 = arith.constant 0 : i32
    %c0_i32_1 = arith.constant 0 : i32
    %c0_i32_2 = arith.constant 0 : i32
    return %c0_i32, %c0_i32_0, %c0_i32_1 : i32, i32, i32
  }
  func.func @transform_3(%arg0: i32) -> (i32, i32, i32) {
    %c0_i32 = arith.constant 0 : i32
    %c0_i32_0 = arith.constant 0 : i32
    %c0_i32_1 = arith.constant 0 : i32
    %c0_i32_2 = arith.constant 0 : i32
    return %c0_i32, %c0_i32_0, %c0_i32_1 : i32, i32, i32
  }
  func.func @transform_4(%arg0: i32) -> (i32, i32) {
    %c0_i32 = arith.constant 0 : i32
    %c0_i32_0 = arith.constant 0 : i32
    %c0_i32_1 = arith.constant 0 : i32
    return %c0_i32, %c0_i32_0 : i32, i32
  }
}

</mosaic_0001>

<llo_original>
// kernel: graphnet1_forward.1
$region0: #{graphnet1_forward.1}
  #allocation0 [shape = 'u32[]', space=smem, size = 0x4, offset = 0x4, fixed_abs, tag = 'smem constant byte address 0x4 - core index']
  #allocation1 [shape = 'u32[144,128]{1,0:T(1,128)}', space=vmem, size = 0x12000, scoped, tag = 'internal scratch']
  %s0 = inlined_call_operand.vmem [shape: bf16[16,16], index: 0, kind: input, shape index: {}]
  %s1 = inlined_call_operand.vmem [shape: f32[16,128], index: 1, kind: input, shape index: {}]
  %s2 = inlined_call_operand.hbm [shape: bf16[4,128,128], index: 2, kind: input, shape index: {}]
  %s3 = inlined_call_operand.vmem [shape: f32[4,1,128], index: 3, kind: input, shape index: {}]
  %s4 = inlined_call_operand.vmem [shape: f32[16,128], index: 4, kind: output, shape index: {}]
  %s5 = sld [smem:[#allocation0]]
  $region30: #{graphnet1_forward.1} parent=0
    _
  %s7 = ssub.s32 1, %s5
  %s8 = scalar_select 0, %s7, %s5
  $region1: #{graphnet1_forward.1} parent=0
    #allocation2 [shape = 'u8[131072]{0}', space=vmem, size = 0x20000, scoped, tag = 'input window, operand 2, single buffered']
    #allocation3 [shape = 's32[1]{0}', space=sflag, size = 0x4, scoped, tag = 'scoped memory for graphnet1_forward.1']
    %9 = vsyncpa [#allocation3], 0
    // Predicated region
    $region2: #{graphnet1_forward.1} parent=1 // pred_check
      _
    $region3: #{graphnet1_forward.1} parent=1 // pred_check_branch
      %11 = sbr.rel (0) target = $region5
    $region4: #{graphnet1_forward.1} parent=1 // pred_region
      _
    $region5: #{graphnet1_forward.1} parent=1 // pred_fallthru
      _
    // Predicated region
    $region6: #{graphnet1_forward.1} parent=1 // pred_check
      _
    $region7: #{graphnet1_forward.1} parent=1 // pred_check_branch
      %13 = sbr.rel (0) target = $region9
    $region8: #{graphnet1_forward.1} parent=1 // pred_region
      _
    $region9: #{graphnet1_forward.1} parent=1 // pred_fallthru
      _
    // Predicated region
    $region10: #{graphnet1_forward.1} parent=1 // pred_check
      _
    $region11: #{graphnet1_forward.1} parent=1 // pred_check_branch
      %15 = sbr.rel (0) target = $region13
    $region12: #{graphnet1_forward.1} parent=1 // pred_region
      %s17 = ssub.s32 4096, 4096
      %18 = vsyncadd [#allocation3], %s17
      %s19 = sshll.u32 [#allocation2], 4
      %s20 = int_to_ptr.vmem [resolvable:$true] %s19
      %25 = dma.hbm_to_vmem [thread:$0]  %s2, 4096, %s20, [#allocation3], 64, 64, 4
    $region13: #{graphnet1_forward.1} parent=1 // pred_fallthru
      _
    // Predicated region
    $region14: #{graphnet1_forward.1} parent=1 // pred_check
      _
    $region15: #{graphnet1_forward.1} parent=1 // pred_check_branch
      %27 = sbr.rel (0) target = $region17
    $region16: #{graphnet1_forward.1} parent=1 // pred_region
      _
    $region17: #{graphnet1_forward.1} parent=1 // pred_fallthru
      _
    // Predicated region
    $region18: #{graphnet1_forward.1} parent=1 // pred_check
      _
    $region19: #{graphnet1_forward.1} parent=1 // pred_check_branch
      %29 = sbr.rel (0) target = $region21
    $region20: #{graphnet1_forward.1} parent=1 // pred_region
      %30 = dma.done [#allocation3], 4096
    $region21: #{graphnet1_forward.1} parent=1 // pred_fallthru
      _
    %v32 = vld [vmem:[%s0] sm:$0xf]
    %v33 = vld [vmem:[%s0 + $0x4] sm:$0xf]
    %v34 = vld [vmem:[%s1] sm:$0xff]
    %v35 = vld [vmem:[%s1 + $0x8] sm:$0xff]
    %v36 = vpack.c.bf16 %v35, %v34
    %v37 = vld [vmem:[#allocation2] sm:$0xf]
    %v38 = vld [vmem:[#allocation2 + $0x4] sm:$0xf]
    %v39 = vld [vmem:[#allocation2 + $0x8] sm:$0xf]
    %v40 = vld [vmem:[#allocation2 + $0xc] sm:$0xf]
    %v41 = vld [vmem:[#allocation2 + $0x10] sm:$0xf]
    %v42 = vld [vmem:[#allocation2 + $0x14] sm:$0xf]
    %v43 = vld [vmem:[#allocation2 + $0x18] sm:$0xf]
    %v44 = vld [vmem:[#allocation2 + $0x1c] sm:$0xf]
    %v45 = vld [vmem:[#allocation2 + $0x20] sm:$0xf]
    %v46 = vld [vmem:[#allocation2 + $0x24] sm:$0xf]
    %v47 = vld [vmem:[#allocation2 + $0x28] sm:$0xf]
    %v48 = vld [vmem:[#allocation2 + $0x2c] sm:$0xf]
    %v49 = vld [vmem:[#allocation2 + $0x30] sm:$0xf]
    %v50 = vld [vmem:[#allocation2 + $0x34] sm:$0xf]
    %v51 = vld [vmem:[#allocation2 + $0x38] sm:$0xf]
    %v52 = vld [vmem:[#allocation2 + $0x3c] sm:$0xf]
    %v69 = vunpack.c.l.b16 %v37
    %v70 = vunpack.c.l.b16 %v38
    %v71 = vunpack.c.l.b16 %v39
    %v72 = vunpack.c.l.b16 %v40
    %v73 = vunpack.c.l.b16 %v41
    %v74 = vunpack.c.l.b16 %v42
    %v75 = vunpack.c.l.b16 %v43
    %v76 = vunpack.c.l.b16 %v44
    %v77 = vunpack.c.l.b16 %v45
    %v78 = vunpack.c.l.b16 %v46
    %v79 = vunpack.c.l.b16 %v47
    %v80 = vunpack.c.l.b16 %v48
    %v81 = vunpack.c.l.b16 %v49
    %v82 = vunpack.c.l.b16 %v50
    %v83 = vunpack.c.l.b16 %v51
    %v84 = vunpack.c.l.b16 %v52
    %v85 = vpack.c.b16 %v70, %v69
    %v86 = vpack.c.b16 %v72, %v71
    %v87 = vpack.c.b16 %v74, %v73
    %v88 = vpack.c.b16 %v76, %v75
    %v89 = vpack.c.b16 %v78, %v77
    %v90 = vpack.c.b16 %v80, %v79
    %v91 = vpack.c.b16 %v82, %v81
    %v92 = vpack.c.b16 %v84, %v83
    %101 = vmatprep.subr.bf16.mxu0 0
    %102 = vmatpush1.bf16.msra.mxu0 %v92
    %103 = vmatprep.subr.bf16.mxu0 0
    %104 = vmatpush1.bf16.msra.mxu0 %v91
    %105 = vmatprep.subr.bf16.mxu0 0
    %106 = vmatpush1.bf16.msra.mxu0 %v90
    %107 = vmatprep.subr.bf16.mxu0 0
    %108 = vmatpush1.bf16.msra.mxu0 %v89
    %109 = vmatprep.subr.bf16.mxu0 0
    %110 = vmatpush1.bf16.msra.mxu0 %v88
    %111 = vmatprep.subr.bf16.mxu0 0
    %112 = vmatpush1.bf16.msra.mxu0 %v87
    %113 = vmatprep.subr.bf16.mxu0 0
    %114 = vmatpush1.bf16.msra.mxu0 %v86
    %115 = vmatprep.subr.bf16.mxu0 0
    %116 = vmatpush1.bf16.msra.mxu0 %v85
    %117 = vmatprep.subr.bf16.mxu0 0
    %118 = vmatpush2.bf16.msra.mxu0 0
    %119 = vmatprep.subr.bf16.mxu0 0
    %120 = vmatpush2.bf16.msra.mxu0 0
    %121 = vmatprep.subr.bf16.mxu0 0
    %122 = vmatpush2.bf16.msra.mxu0 0
    %123 = vmatprep.subr.bf16.mxu0 0
    %124 = vmatpush2.bf16.msra.mxu0 0
    %125 = vmatprep.subr.bf16.mxu0 0
    %126 = vmatpush2.bf16.msra.mxu0 0
    %127 = vmatprep.subr.bf16.mxu0 0
    %128 = vmatpush2.bf16.msra.mxu0 0
    %129 = vmatprep.subr.bf16.mxu0 0
    %130 = vmatpush2.bf16.msra.mxu0 0
    %131 = vmatprep.subr.bf16.mxu0 0
    %132 = vmatpush2.bf16.msra.mxu0 0
    %133 = vmatprep.mubr.bf16.mxu0 0
    %134 = vmatmul.mubr.bf16.gmra.mxu0 %v36
    %v135 = vpop.f32.mrf.mxu0
    %v136 = vadd.f32 0.0, %v135
    %v137 = vpop.f32.mrf.mxu0
    %v138 = vpop.f32.mrf.mxu0
    %v139 = vadd.f32 0.0, %v138
    %v140 = vpop.f32.mrf.mxu0
    %141 = vdwg.mxu0
    %v142 = vpack.c.bf16 %v139, %v136
    %v143 = vld [vmem:[%s3] sm:$0x1]
    %v145 = vlaneseq
    %v146 = vshrl.u32 %v145, 7
    %v147 = vsub.s32 0, %v146
    %v148 = vrot.slane %v143, %v147
    %v152 = vunpack.c.l.b16 %v32
    %v153 = vunpack.c.l.b16 %v33
    %v154 = vpack.c.b16 %v153, %v152
    %vm155 = vcmask 130048
    %v157 = vsel %vm155, %v154, 0
    %159 = vmatprep.subr.bf16.mxu0 0
    %160 = vmatpush1.bf16.msra.mxu0 0
    %161 = vmatprep.subr.bf16.mxu0 0
    %162 = vmatpush1.bf16.msra.mxu0 0
    %163 = vmatprep.subr.bf16.mxu0 0
    %164 = vmatpush1.bf16.msra.mxu0 0
    %165 = vmatprep.subr.bf16.mxu0 0
    %166 = vmatpush1.bf16.msra.mxu0 0
    %167 = vmatprep.subr.bf16.mxu0 0
    %168 = vmatpush1.bf16.msra.mxu0 0
    %169 = vmatprep.subr.bf16.mxu0 0
    %170 = vmatpush1.bf16.msra.mxu0 0
    %171 = vmatprep.subr.bf16.mxu0 0
    %172 = vmatpush1.bf16.msra.mxu0 0
    %173 = vmatprep.subr.bf16.mxu0 0
    %174 = vmatpush1.bf16.msra.mxu0 %v142
    %175 = vmatprep.subr.bf16.mxu0 0
    %176 = vmatpush2.bf16.msra.mxu0 0
    %177 = vmatprep.subr.bf16.mxu0 0
    %178 = vmatpush2.bf16.msra.mxu0 0
    %179 = vmatprep.subr.bf16.mxu0 0
    %180 = vmatpush2.bf16.msra.mxu0 0
    %181 = vmatprep.subr.bf16.mxu0 0
    %182 = vmatpush2.bf16.msra.mxu0 0
    %183 = vmatprep.subr.bf16.mxu0 0
    %184 = vmatpush2.bf16.msra.mxu0 0
    %185 = vmatprep.subr.bf16.mxu0 0
    %186 = vmatpush2.bf16.msra.mxu0 0
    %187 = vmatprep.subr.bf16.mxu0 0
    %188 = vmatpush2.bf16.msra.mxu0 0
    %189 = vmatprep.subr.bf16.mxu0 0
    %190 = vmatpush2.bf16.msra.mxu0 0
    %191 = vmatprep.mubr.bf16.mxu0 0
    %192 = vmatmul.mubr.bf16.gmra.mxu0 %v157
    %v193 = vpop.f32.mrf.mxu0
    %v194 = vadd.f32 %v148, %v193
    %v195 = vpop.f32.mrf.mxu0
    %v196 = vpop.f32.mrf.mxu0
    %v197 = vadd.f32 %v148, %v196
    %v198 = vpop.f32.mrf.mxu0
    %199 = vdwg.mxu0
    %v200 = vmax.f32 %v194, 0.0
    %v201 = vmax.f32 %v197, 0.0
    %v202 = vpack.c.bf16 %v201, %v200
    %s203 = scalar_lea.vmem [#allocation2], 64
    %v204 = vld [vmem:[%s203] sm:$0xf]
    %v205 = vld [vmem:[%s203 + $0x4] sm:$0xf]
    %v206 = vld [vmem:[%s203 + $0x8] sm:$0xf]
    %v207 = vld [vmem:[%s203 + $0xc] sm:$0xf]
    %v208 = vld [vmem:[%s203 + $0x10] sm:$0xf]
    %v209 = vld [vmem:[%s203 + $0x14] sm:$0xf]
    %v210 = vld [vmem:[%s203 + $0x18] sm:$0xf]
    %v211 = vld [vmem:[%s203 + $0x1c] sm:$0xf]
    %v212 = vld [vmem:[%s203 + $0x20] sm:$0xf]
    %v213 = vld [vmem:[%s203 + $0x24] sm:$0xf]
    %v214 = vld [vmem:[%s203 + $0x28] sm:$0xf]
    %v215 = vld [vmem:[%s203 + $0x2c] sm:$0xf]
    %v216 = vld [vmem:[%s203 + $0x30] sm:$0xf]
    %v217 = vld [vmem:[%s203 + $0x34] sm:$0xf]
    %v218 = vld [vmem:[%s203 + $0x38] sm:$0xf]
    %v219 = vld [vmem:[%s203 + $0x3c] sm:$0xf]
    %v236 = vunpack.c.l.b16 %v204
    %v237 = vunpack.c.l.b16 %v205
    %v238 = vunpack.c.l.b16 %v206
    %v239 = vunpack.c.l.b16 %v207
    %v240 = vunpack.c.l.b16 %v208
    %v241 = vunpack.c.l.b16 %v209
    %v242 = vunpack.c.l.b16 %v210
    %v243 = vunpack.c.l.b16 %v211
    %v244 = vunpack.c.l.b16 %v212
    %v245 = vunpack.c.l.b16 %v213
    %v246 = vunpack.c.l.b16 %v214
    %v247 = vunpack.c.l.b16 %v215
    %v248 = vunpack.c.l.b16 %v216
    %v249 = vunpack.c.l.b16 %v217
    %v250 = vunpack.c.l.b16 %v218
    %v251 = vunpack.c.l.b16 %v219
    %v252 = vpack.c.b16 %v237, %v236
    %v253 = vpack.c.b16 %v239, %v238
    %v254 = vpack.c.b16 %v241, %v240
    %v255 = vpack.c.b16 %v243, %v242
    %v256 = vpack.c.b16 %v245, %v244
    %v257 = vpack.c.b16 %v247, %v246
    %v258 = vpack.c.b16 %v249, %v248
    %v259 = vpack.c.b16 %v251, %v250
    %268 = vmatprep.subr.bf16.mxu0 0
    %269 = vmatpush1.bf16.msra.mxu0 %v259
    %270 = vmatprep.subr.bf16.mxu0 0
    %271 = vmatpush1.bf16.msra.mxu0 %v258
    %272 = vmatprep.subr.bf16.mxu0 0
    %273 = vmatpush1.bf16.msra.mxu0 %v257
    %274 = vmatprep.subr.bf16.mxu0 0
    %275 = vmatpush1.bf16.msra.mxu0 %v256
    %276 = vmatprep.subr.bf16.mxu0 0
    %277 = vmatpush1.bf16.msra.mxu0 %v255
    %278 = vmatprep.subr.bf16.mxu0 0
    %279 = vmatpush1.bf16.msra.mxu0 %v254
    %280 = vmatprep.subr.bf16.mxu0 0
    %281 = vmatpush1.bf16.msra.mxu0 %v253
    %282 = vmatprep.subr.bf16.mxu0 0
    %283 = vmatpush1.bf16.msra.mxu0 %v252
    %284 = vmatprep.subr.bf16.mxu0 0
    %285 = vmatpush2.bf16.msra.mxu0 0
    %286 = vmatprep.subr.bf16.mxu0 0
    %287 = vmatpush2.bf16.msra.mxu0 0
    %288 = vmatprep.subr.bf16.mxu0 0
    %289 = vmatpush2.bf16.msra.mxu0 0
    %290 = vmatprep.subr.bf16.mxu0 0
    %291 = vmatpush2.bf16.msra.mxu0 0
    %292 = vmatprep.subr.bf16.mxu0 0
    %293 = vmatpush2.bf16.msra.mxu0 0
    %294 = vmatprep.subr.bf16.mxu0 0
    %295 = vmatpush2.bf16.msra.mxu0 0
    %296 = vmatprep.subr.bf16.mxu0 0
    %297 = vmatpush2.bf16.msra.mxu0 0
    %298 = vmatprep.subr.bf16.mxu0 0
    %299 = vmatpush2.bf16.msra.mxu0 0
    %300 = vmatprep.mubr.bf16.mxu0 0
    %301 = vmatmul.mubr.bf16.gmra.mxu0 %v202
    %v302 = vpop.f32.mrf.mxu0
    %v303 = vadd.f32 0.0, %v302
    %v304 = vpop.f32.mrf.mxu0
    %v305 = vpop.f32.mrf.mxu0
    %v306 = vadd.f32 0.0, %v305
    %v307 = vpop.f32.mrf.mxu0
    %308 = vdwg.mxu0
    %v309 = vpack.c.bf16 %v306, %v303
    %s310 = scalar_lea.vmem %s3, 1
    %v311 = vld [vmem:[%s310] sm:$0x1]
    %v313 = vlaneseq
    %v314 = vshrl.u32 %v313, 7
    %v315 = vsub.s32 0, %v314
    %v316 = vrot.slane %v311, %v315
    %318 = vmatprep.subr.bf16.mxu0 0
    %319 = vmatpush1.bf16.msra.mxu0 0
    %320 = vmatprep.subr.bf16.mxu0 0
    %321 = vmatpush1.bf16.msra.mxu0 0
    %322 = vmatprep.subr.bf16.mxu0 0
    %323 = vmatpush1.bf16.msra.mxu0 0
    %324 = vmatprep.subr.bf16.mxu0 0
    %325 = vmatpush1.bf16.msra.mxu0 0
    %326 = vmatprep.subr.bf16.mxu0 0
    %327 = vmatpush1.bf16.msra.mxu0 0
    %328 = vmatprep.subr.bf16.mxu0 0
    %329 = vmatpush1.bf16.msra.mxu0 0
    %330 = vmatprep.subr.bf16.mxu0 0
    %331 = vmatpush1.bf16.msra.mxu0 0
    %332 = vmatprep.subr.bf16.mxu0 0
    %333 = vmatpush1.bf16.msra.mxu0 %v309
    %334 = vmatprep.subr.bf16.mxu0 0
    %335 = vmatpush2.bf16.msra.mxu0 0
    %336 = vmatprep.subr.bf16.mxu0 0
    %337 = vmatpush2.bf16.msra.mxu0 0
    %338 = vmatprep.subr.bf16.mxu0 0
    %339 = vmatpush2.bf16.msra.mxu0 0
    %340 = vmatprep.subr.bf16.mxu0 0
    %341 = vmatpush2.bf16.msra.mxu0 0
    %342 = vmatprep.subr.bf16.mxu0 0
    %343 = vmatpush2.bf16.msra.mxu0 0
    %344 = vmatprep.subr.bf16.mxu0 0
    %345 = vmatpush2.bf16.msra.mxu0 0
    %346 = vmatprep.subr.bf16.mxu0 0
    %347 = vmatpush2.bf16.msra.mxu0 0
    %348 = vmatprep.subr.bf16.mxu0 0
    %349 = vmatpush2.bf16.msra.mxu0 0
    %350 = vmatprep.mubr.bf16.mxu0 0
    %351 = vmatmul.mubr.bf16.gmra.mxu0 %v157
    %v352 = vpop.f32.mrf.mxu0
    %v353 = vadd.f32 %v316, %v352
    %v354 = vpop.f32.mrf.mxu0
    %v355 = vpop.f32.mrf.mxu0
    %v356 = vadd.f32 %v316, %v355
    %v357 = vpop.f32.mrf.mxu0
    %358 = vdwg.mxu0
    %v359 = vmax.f32 %v353, 0.0
    %v360 = vmax.f32 %v356, 0.0
    %v361 = vpack.c.bf16 %v360, %v359
    %s362 = scalar_lea.vmem [#allocation2], 128
    %v363 = vld [vmem:[%s362] sm:$0xf]
    %v364 = vld [vmem:[%s362 + $0x4] sm:$0xf]
    %v365 = vld [vmem:[%s362 + $0x8] sm:$0xf]
    %v366 = vld [vmem:[%s362 + $0xc] sm:$0xf]
    %v367 = vld [vmem:[%s362 + $0x10] sm:$0xf]
    %v368 = vld [vmem:[%s362 + $0x14] sm:$0xf]
    %v369 = vld [vmem:[%s362 + $0x18] sm:$0xf]
    %v370 = vld [vmem:[%s362 + $0x1c] sm:$0xf]
    %v371 = vld [vmem:[%s362 + $0x20] sm:$0xf]
    %v372 = vld [vmem:[%s362 + $0x24] sm:$0xf]
    %v373 = vld [vmem:[%s362 + $0x28] sm:$0xf]
    %v374 = vld [vmem:[%s362 + $0x2c] sm:$0xf]
    %v375 = vld [vmem:[%s362 + $0x30] sm:$0xf]
    %v376 = vld [vmem:[%s362 + $0x34] sm:$0xf]
    %v377 = vld [vmem:[%s362 + $0x38] sm:$0xf]
    %v378 = vld [vmem:[%s362 + $0x3c] sm:$0xf]
    %v395 = vunpack.c.l.b16 %v363
    %v396 = vunpack.c.l.b16 %v364
    %v397 = vunpack.c.l.b16 %v365
    %v398 = vunpack.c.l.b16 %v366
    %v399 = vunpack.c.l.b16 %v367
    %v400 = vunpack.c.l.b16 %v368
    %v401 = vunpack.c.l.b16 %v369
    %v402 = vunpack.c.l.b16 %v370
    %v403 = vunpack.c.l.b16 %v371
    %v404 = vunpack.c.l.b16 %v372
    %v405 = vunpack.c.l.b16 %v373
    %v406 = vunpack.c.l.b16 %v374
    %v407 = vunpack.c.l.b16 %v375
    %v408 = vunpack.c.l.b16 %v376
    %v409 = vunpack.c.l.b16 %v377
    %v410 = vunpack.c.l.b16 %v378
    %v411 = vpack.c.b16 %v396, %v395
    %v412 = vpack.c.b16 %v398, %v397
    %v413 = vpack.c.b16 %v400, %v399
    %v414 = vpack.c.b16 %v402, %v401
    %v415 = vpack.c.b16 %v404, %v403
    %v416 = vpack.c.b16 %v406, %v405
    %v417 = vpack.c.b16 %v408, %v407
    %v418 = vpack.c.b16 %v410, %v409
    %427 = vmatprep.subr.bf16.mxu0 0
    %428 = vmatpush1.bf16.msra.mxu0 %v418
    %429 = vmatprep.subr.bf16.mxu0 0
    %430 = vmatpush1.bf16.msra.mxu0 %v417
    %431 = vmatprep.subr.bf16.mxu0 0
    %432 = vmatpush1.bf16.msra.mxu0 %v416
    %433 = vmatprep.subr.bf16.mxu0 0
    %434 = vmatpush1.bf16.msra.mxu0 %v415
    %435 = vmatprep.subr.bf16.mxu0 0
    %436 = vmatpush1.bf16.msra.mxu0 %v414
    %437 = vmatprep.subr.bf16.mxu0 0
    %438 = vmatpush1.bf16.msra.mxu0 %v413
    %439 = vmatprep.subr.bf16.mxu0 0
    %440 = vmatpush1.bf16.msra.mxu0 %v412
    %441 = vmatprep.subr.bf16.mxu0 0
    %442 = vmatpush1.bf16.msra.mxu0 %v411
    %443 = vmatprep.subr.bf16.mxu0 0
    %444 = vmatpush2.bf16.msra.mxu0 0
    %445 = vmatprep.subr.bf16.mxu0 0
    %446 = vmatpush2.bf16.msra.mxu0 0
    %447 = vmatprep.subr.bf16.mxu0 0
    %448 = vmatpush2.bf16.msra.mxu0 0
    %449 = vmatprep.subr.bf16.mxu0 0
    %450 = vmatpush2.bf16.msra.mxu0 0
    %451 = vmatprep.subr.bf16.mxu0 0
    %452 = vmatpush2.bf16.msra.mxu0 0
    %453 = vmatprep.subr.bf16.mxu0 0
    %454 = vmatpush2.bf16.msra.mxu0 0
    %455 = vmatprep.subr.bf16.mxu0 0
    %456 = vmatpush2.bf16.msra.mxu0 0
    %457 = vmatprep.subr.bf16.mxu0 0
    %458 = vmatpush2.bf16.msra.mxu0 0
    %459 = vmatprep.mubr.bf16.mxu0 0
    %460 = vmatmul.mubr.bf16.gmra.mxu0 %v361
    %v461 = vpop.f32.mrf.mxu0
    %v462 = vadd.f32 0.0, %v461
    %v463 = vpop.f32.mrf.mxu0
    %v464 = vpop.f32.mrf.mxu0
    %v465 = vadd.f32 0.0, %v464
    %v466 = vpop.f32.mrf.mxu0
    %467 = vdwg.mxu0
    %v468 = vpack.c.bf16 %v465, %v462
    %s469 = scalar_lea.vmem %s3, 2
    %v470 = vld [vmem:[%s469] sm:$0x1]
    %v472 = vlaneseq
    %v473 = vshrl.u32 %v472, 7
    %v474 = vsub.s32 0, %v473
    %v475 = vrot.slane %v470, %v474
    %477 = vmatprep.subr.bf16.mxu0 0
    %478 = vmatpush1.bf16.msra.mxu0 0
    %479 = vmatprep.subr.bf16.mxu0 0
    %480 = vmatpush1.bf16.msra.mxu0 0
    %481 = vmatprep.subr.bf16.mxu0 0
    %482 = vmatpush1.bf16.msra.mxu0 0
    %483 = vmatprep.subr.bf16.mxu0 0
    %484 = vmatpush1.bf16.msra.mxu0 0
    %485 = vmatprep.subr.bf16.mxu0 0
    %486 = vmatpush1.bf16.msra.mxu0 0
    %487 = vmatprep.subr.bf16.mxu0 0
    %488 = vmatpush1.bf16.msra.mxu0 0
    %489 = vmatprep.subr.bf16.mxu0 0
    %490 = vmatpush1.bf16.msra.mxu0 0
    %491 = vmatprep.subr.bf16.mxu0 0
    %492 = vmatpush1.bf16.msra.mxu0 %v468
    %493 = vmatprep.subr.bf16.mxu0 0
    %494 = vmatpush2.bf16.msra.mxu0 0
    %495 = vmatprep.subr.bf16.mxu0 0
    %496 = vmatpush2.bf16.msra.mxu0 0
    %497 = vmatprep.subr.bf16.mxu0 0
    %498 = vmatpush2.bf16.msra.mxu0 0
    %499 = vmatprep.subr.bf16.mxu0 0
    %500 = vmatpush2.bf16.msra.mxu0 0
    %501 = vmatprep.subr.bf16.mxu0 0
    %502 = vmatpush2.bf16.msra.mxu0 0
    %503 = vmatprep.subr.bf16.mxu0 0
    %504 = vmatpush2.bf16.msra.mxu0 0
    %505 = vmatprep.subr.bf16.mxu0 0
    %506 = vmatpush2.bf16.msra.mxu0 0
    %507 = vmatprep.subr.bf16.mxu0 0
    %508 = vmatpush2.bf16.msra.mxu0 0
    %509 = vmatprep.mubr.bf16.mxu0 0
    %510 = vmatmul.mubr.bf16.gmra.mxu0 %v157
    %v511 = vpop.f32.mrf.mxu0
    %v512 = vadd.f32 %v475, %v511
    %v513 = vpop.f32.mrf.mxu0
    %v514 = vpop.f32.mrf.mxu0
    %v515 = vadd.f32 %v475, %v514
    %v516 = vpop.f32.mrf.mxu0
    %517 = vdwg.mxu0
    %v518 = vmax.f32 %v512, 0.0
    %v519 = vmax.f32 %v515, 0.0
    %v520 = vpack.c.bf16 %v519, %v518
    %s521 = scalar_lea.vmem [#allocation2], 192
    %v522 = vld [vmem:[%s521] sm:$0xf]
    %v523 = vld [vmem:[%s521 + $0x4] sm:$0xf]
    %v524 = vld [vmem:[%s521 + $0x8] sm:$0xf]
    %v525 = vld [vmem:[%s521 + $0xc] sm:$0xf]
    %v526 = vld [vmem:[%s521 + $0x10] sm:$0xf]
    %v527 = vld [vmem:[%s521 + $0x14] sm:$0xf]
    %v528 = vld [vmem:[%s521 + $0x18] sm:$0xf]
    %v529 = vld [vmem:[%s521 + $0x1c] sm:$0xf]
    %v530 = vld [vmem:[%s521 + $0x20] sm:$0xf]
    %v531 = vld [vmem:[%s521 + $0x24] sm:$0xf]
    %v532 = vld [vmem:[%s521 + $0x28] sm:$0xf]
    %v533 = vld [vmem:[%s521 + $0x2c] sm:$0xf]
    %v534 = vld [vmem:[%s521 + $0x30] sm:$0xf]
    %v535 = vld [vmem:[%s521 + $0x34] sm:$0xf]
    %v536 = vld [vmem:[%s521 + $0x38] sm:$0xf]
    %v537 = vld [vmem:[%s521 + $0x3c] sm:$0xf]
    %v554 = vunpack.c.l.b16 %v522
    %v555 = vunpack.c.l.b16 %v523
    %v556 = vunpack.c.l.b16 %v524
    %v557 = vunpack.c.l.b16 %v525
    %v558 = vunpack.c.l.b16 %v526
    %v559 = vunpack.c.l.b16 %v527
    %v560 = vunpack.c.l.b16 %v528
    %v561 = vunpack.c.l.b16 %v529
    %v562 = vunpack.c.l.b16 %v530
    %v563 = vunpack.c.l.b16 %v531
    %v564 = vunpack.c.l.b16 %v532
    %v565 = vunpack.c.l.b16 %v533
    %v566 = vunpack.c.l.b16 %v534
    %v567 = vunpack.c.l.b16 %v535
    %v568 = vunpack.c.l.b16 %v536
    %v569 = vunpack.c.l.b16 %v537
    %v570 = vpack.c.b16 %v555, %v554
    %v571 = vpack.c.b16 %v557, %v556
    %v572 = vpack.c.b16 %v559, %v558
    %v573 = vpack.c.b16 %v561, %v560
    %v574 = vpack.c.b16 %v563, %v562
    %v575 = vpack.c.b16 %v565, %v564
    %v576 = vpack.c.b16 %v567, %v566
    %v577 = vpack.c.b16 %v569, %v568
    %586 = vmatprep.subr.bf16.mxu0 0
    %587 = vmatpush1.bf16.msra.mxu0 %v577
    %588 = vmatprep.subr.bf16.mxu0 0
    %589 = vmatpush1.bf16.msra.mxu0 %v576
    %590 = vmatprep.subr.bf16.mxu0 0
    %591 = vmatpush1.bf16.msra.mxu0 %v575
    %592 = vmatprep.subr.bf16.mxu0 0
    %593 = vmatpush1.bf16.msra.mxu0 %v574
    %594 = vmatprep.subr.bf16.mxu0 0
    %595 = vmatpush1.bf16.msra.mxu0 %v573
    %596 = vmatprep.subr.bf16.mxu0 0
    %597 = vmatpush1.bf16.msra.mxu0 %v572
    %598 = vmatprep.subr.bf16.mxu0 0
    %599 = vmatpush1.bf16.msra.mxu0 %v571
    %600 = vmatprep.subr.bf16.mxu0 0
    %601 = vmatpush1.bf16.msra.mxu0 %v570
    %602 = vmatprep.subr.bf16.mxu0 0
    %603 = vmatpush2.bf16.msra.mxu0 0
    %604 = vmatprep.subr.bf16.mxu0 0
    %605 = vmatpush2.bf16.msra.mxu0 0
    %606 = vmatprep.subr.bf16.mxu0 0
    %607 = vmatpush2.bf16.msra.mxu0 0
    %608 = vmatprep.subr.bf16.mxu0 0
    %609 = vmatpush2.bf16.msra.mxu0 0
    %610 = vmatprep.subr.bf16.mxu0 0
    %611 = vmatpush2.bf16.msra.mxu0 0
    %612 = vmatprep.subr.bf16.mxu0 0
    %613 = vmatpush2.bf16.msra.mxu0 0
    %614 = vmatprep.subr.bf16.mxu0 0
    %615 = vmatpush2.bf16.msra.mxu0 0
    %616 = vmatprep.subr.bf16.mxu0 0
    %617 = vmatpush2.bf16.msra.mxu0 0
    %618 = vmatprep.mubr.bf16.mxu0 0
    %619 = vmatmul.mubr.bf16.gmra.mxu0 %v520
    %v620 = vpop.f32.mrf.mxu0
    %v621 = vadd.f32 0.0, %v620
    %v622 = vpop.f32.mrf.mxu0
    %v623 = vpop.f32.mrf.mxu0
    %v624 = vadd.f32 0.0, %v623
    %v625 = vpop.f32.mrf.mxu0
    %626 = vdwg.mxu0
    %v627 = vpack.c.bf16 %v624, %v621
    %s628 = scalar_lea.vmem %s3, 3
    %v629 = vld [vmem:[%s628] sm:$0x1]
    %v631 = vlaneseq
    %v632 = vshrl.u32 %v631, 7
    %v633 = vsub.s32 0, %v632
    %v634 = vrot.slane %v629, %v633
    %636 = vmatprep.subr.bf16.mxu0 0
    %637 = vmatpush1.bf16.msra.mxu0 0
    %638 = vmatprep.subr.bf16.mxu0 0
    %639 = vmatpush1.bf16.msra.mxu0 0
    %640 = vmatprep.subr.bf16.mxu0 0
    %641 = vmatpush1.bf16.msra.mxu0 0
    %642 = vmatprep.subr.bf16.mxu0 0
    %643 = vmatpush1.bf16.msra.mxu0 0
    %644 = vmatprep.subr.bf16.mxu0 0
    %645 = vmatpush1.bf16.msra.mxu0 0
    %646 = vmatprep.subr.bf16.mxu0 0
    %647 = vmatpush1.bf16.msra.mxu0 0
    %648 = vmatprep.subr.bf16.mxu0 0
    %649 = vmatpush1.bf16.msra.mxu0 0
    %650 = vmatprep.subr.bf16.mxu0 0
    %651 = vmatpush1.bf16.msra.mxu0 %v627
    %652 = vmatprep.subr.bf16.mxu0 0
    %653 = vmatpush2.bf16.msra.mxu0 0
    %654 = vmatprep.subr.bf16.mxu0 0
    %655 = vmatpush2.bf16.msra.mxu0 0
    %656 = vmatprep.subr.bf16.mxu0 0
    %657 = vmatpush2.bf16.msra.mxu0 0
    %658 = vmatprep.subr.bf16.mxu0 0
    %659 = vmatpush2.bf16.msra.mxu0 0
    %660 = vmatprep.subr.bf16.mxu0 0
    %661 = vmatpush2.bf16.msra.mxu0 0
    %662 = vmatprep.subr.bf16.mxu0 0
    %663 = vmatpush2.bf16.msra.mxu0 0
    %664 = vmatprep.subr.bf16.mxu0 0
    %665 = vmatpush2.bf16.msra.mxu0 0
    %666 = vmatprep.subr.bf16.mxu0 0
    %667 = vmatpush2.bf16.msra.mxu0 0
    %668 = vmatprep.mubr.bf16.mxu0 0
    %669 = vmatmul.mubr.bf16.gmra.mxu0 %v157
    %v670 = vpop.f32.mrf.mxu0
    %v671 = vadd.f32 %v634, %v670
    %v672 = vpop.f32.mrf.mxu0
    %v673 = vpop.f32.mrf.mxu0
    %v674 = vadd.f32 %v634, %v673
    %v675 = vpop.f32.mrf.mxu0
    %676 = vdwg.mxu0
    %v677 = vmax.f32 %v671, 0.0
    %v678 = vmax.f32 %v674, 0.0
    %v679 = vxor.u32 %v677, 2147483648
    %v680 = vxor.u32 %v678, 2147483648
    %v681 = vmul.f32 %v679, 1.442695
    %v682 = vpow.pop %v681
    %v683 = vmul.f32 %v680, 1.442695
    %v684 = vpow.pop %v683
    %v685 = vadd.f32 %v682, 1.0
    %v686 = vadd.f32 %v684, 1.0
    %v687 = vrcp.pop %v685
    %v688 = vmul.f32 1.0, %v687
    %v689 = vrcp.pop %v686
    %v690 = vmul.f32 1.0, %v689
    %691 = vst [vmem:[%s4] sm:$0xff] %v688
    %692 = vst [vmem:[%s4 + $0x8] sm:$0xff] %v690
    // Predicated region
    $region22: #{graphnet1_forward.1} parent=1 // pred_check
      _
    $region23: #{graphnet1_forward.1} parent=1 // pred_check_branch
      %694 = sbr.rel (0) target = $region25
    $region24: #{graphnet1_forward.1} parent=1 // pred_region
      _
    $region25: #{graphnet1_forward.1} parent=1 // pred_fallthru
      _
    // Predicated region
    $region26: #{graphnet1_forward.1} parent=1 // pred_check
      _
    $region27: #{graphnet1_forward.1} parent=1 // pred_check_branch
      %696 = sbr.rel (0) target = $region29
    $region28: #{graphnet1_forward.1} parent=1 // pred_region
      _
    $region29: #{graphnet1_forward.1} parent=1 // pred_fallthru
      _
    %697 = vsyncpa [#allocation3], 1

</llo_original>
